<compile_context>
chip_gen: v7x
topology: tpu7x:2x2x1
jax: 0.10.0
libtpu: 0.0.40
codegen_flags: <defaults>
</compile_context>

<pallas_src>
import functools

import jax
import jax.numpy as jnp
from jax.experimental import pallas as pl
from jax.experimental.pallas import tpu as pltpu


def _chebnet_kernel(x_ref, adj_ref, filt_ref, out_ref, *, K, batch_block):
    # x_ref   : (Bblk, N, Cin)   VMEM tile, native dtype (f32 or bf16)
    # adj_ref : (Bblk, N, N)     VMEM tile, native dtype
    # filt_ref: (K, Cin, Cout)   full filter bank (same block every grid step)
    # out_ref : (Bblk, N, Cout)
    in_dtype = x_ref.dtype
    w = filt_ref[...].astype(in_dtype)          # (K, Cin, Cout), hoisted once

    # Static unroll over the (small) batch block; each element is a 2-D
    # Chebyshev recursion driven entirely on the MXU with f32 accumulation.
    for b in range(batch_block):
        x = x_ref[b]                            # (N, Cin), stays in input dtype
        adj = adj_ref[b]                        # (N, N)

        out = jnp.dot(x, w[0], preferred_element_type=jnp.float32)

        if K > 1:
            # Tx_1 = A @ x
            tx1_f32 = jnp.dot(adj, x, preferred_element_type=jnp.float32)
            tx1 = tx1_f32.astype(in_dtype)
            out = out + jnp.dot(tx1, w[1], preferred_element_type=jnp.float32)

            tx_pp_f32 = x.astype(jnp.float32)   # Tx_{k-2}, kept in f32
            tx_p = tx1                          # Tx_{k-1}, matmul-input dtype
            tx_p_f32 = tx1_f32
            for k in range(2, K):               # K is a compile-time constant
                atx = jnp.dot(adj, tx_p, preferred_element_type=jnp.float32)
                tx_f32 = 2.0 * atx - tx_pp_f32  # combine in f32 (VPU)
                tx = tx_f32.astype(in_dtype)    # cast only as matmul input
                out = out + jnp.dot(tx, w[k], preferred_element_type=jnp.float32)
                tx_pp_f32 = tx_p_f32
                tx_p, tx_p_f32 = tx, tx_f32

        out_ref[b] = out.astype(out_ref.dtype)


def _pick_batch_block(bs, per_elem_vmem, per_elem_hbm, vmem_budget, max_unroll):
    """Largest divisor of bs that fits VMEM, amortizes per-step overhead, and
    (when possible) still leaves >= 2 grid steps for megacore / pipelining."""
    step_traffic_target = 2 * 1024 * 1024      # ~1.5 us of HBM traffic per step
    vmem_cap = max(1, vmem_budget // max(per_elem_vmem, 1))
    work_cap = max(1, -(-step_traffic_target // max(per_elem_hbm, 1)))  # ceil div
    cap = max(1, min(vmem_cap, work_cap, max_unroll, bs))
    divisors = [d for d in range(1, bs + 1) if bs % d == 0 and d <= cap]
    multi_step = [d for d in divisors if bs // d >= 2]
    return max(multi_step) if multi_step else max(divisors)


def chebnet_forward(x, adj_matrix, filters, *, batch_block=None,
                    vmem_budget_bytes=None, max_unroll=16):
    """Pallas ChebNet forward.

    x          : (bs, N, Cin)
    adj_matrix : (bs, N, N)
    filters    : (K, Cin, Cout)
    returns    : (bs, N, Cout)  (same dtype as x)
    """
    bs, N, Cin = x.shape
    K, Cin2, Cout = filters.shape
    assert Cin2 == Cin

    x_isz = jnp.dtype(x.dtype).itemsize
    a_isz = jnp.dtype(adj_matrix.dtype).itemsize
    f_isz = jnp.dtype(filters.dtype).itemsize

    # Per-chip VMEM: 64 MiB on v7x, 128 MiB on v5e/v6e.  Leave headroom for
    # compiler-internal scratch.
    try:
        phys_vmem = int(pltpu.get_tpu_info().vmem_capacity_bytes)
    except Exception:  # conservative fallback (v7x size)
        phys_vmem = 64 * 1024 * 1024
    if vmem_budget_bytes is None:
        vmem_budget_bytes = (phys_vmem * 5) // 8

    # Double-buffered VMEM footprint per batch element (adjacency dominates),
    # plus a little for the f32 Tx temporaries.
    per_elem_vmem = (2 * N * N * a_isz
                     + 2 * N * Cin * x_isz
                     + 2 * N * Cout * x_isz
                     + 4 * N * Cin * 4)
    # HBM traffic per batch element (what a grid step actually moves).
    per_elem_hbm = N * N * a_isz + N * Cin * x_isz + N * Cout * x_isz

    if batch_block is None:
        batch_block = _pick_batch_block(bs, per_elem_vmem, per_elem_hbm,
                                        vmem_budget_bytes, max_unroll)
    assert bs % batch_block == 0
    grid = (bs // batch_block,)

    filt_bytes = filters.size * f_isz
    needed = batch_block * per_elem_vmem + 2 * filt_bytes + (4 << 20)
    # Explicit limit: above v5e's 16 MiB scoped default, below physical VMEM.
    vmem_limit = int(min(phys_vmem - (8 << 20), max(32 << 20, needed)))

    flops = bs * (2 * N * N * Cin * (K - 1) + 2 * N * Cin * Cout * K)
    bytes_accessed = (x.size * x_isz + adj_matrix.size * a_isz + filt_bytes
                      + bs * N * Cout * x_isz)

    kernel = functools.partial(_chebnet_kernel, K=K, batch_block=batch_block)

    return pl.pallas_call(
        kernel,
        out_shape=jax.ShapeDtypeStruct((bs, N, Cout), x.dtype),
        grid_spec=pltpu.PrefetchScalarGridSpec(
            num_scalar_prefetch=0,
            grid=grid,
            in_specs=[
                pl.BlockSpec((batch_block, N, Cin), lambda b: (b, 0, 0)),
                pl.BlockSpec((batch_block, N, N), lambda b: (b, 0, 0)),
                pl.BlockSpec((K, Cin, Cout), lambda b: (0, 0, 0)),
            ],
            out_specs=pl.BlockSpec((batch_block, N, Cout), lambda b: (b, 0, 0)),
        ),
        compiler_params=pltpu.CompilerParams(
            dimension_semantics=("parallel",),
            vmem_limit_bytes=vmem_limit,
        ),
        cost_estimate=pl.CostEstimate(
            flops=int(flops),
            transcendentals=0,
            bytes_accessed=int(bytes_accessed),
        ),
    )(x, adj_matrix, filters)


def chebnet_reference(x, adj_matrix, filters):
    """Pure-JAX reference matching the PyTorch forward exactly."""
    K = filters.shape[0]
    tx0 = x
    out = jnp.matmul(tx0, filters[0])
    if K > 1:
        tx1 = jnp.matmul(adj_matrix, x)
        out = out + jnp.matmul(tx1, filters[1])
        for k in range(2, K):
            tx2 = 2.0 * jnp.matmul(adj_matrix, tx1) - tx0
            out = out + jnp.matmul(tx2, filters[k])
            tx0, tx1 = tx1, tx2
    return out


def xavier_uniform(key, shape, dtype=jnp.float32):
    # PyTorch xavier_uniform_ on a (K, Cin, Cout) tensor:
    #   fan_in = Cin * Cout, fan_out = K * Cout
    K, Cin, Cout = shape
    fan_in = Cin * Cout
    fan_out = K * Cout
    bound = (6.0 / (fan_in + fan_out)) ** 0.5
    return jax.random.uniform(key, shape, dtype, minval=-bound, maxval=bound)


if __name__ == "__main__":
    key = jax.random.PRNGKey(0)
    k_x, k_adj, k_w = jax.random.split(key, 3)

    bs, N, Cin, Cout, K = 2, 16, 4, 8, 3

    x = jax.random.normal(k_x, (bs, N, Cin), dtype=jnp.float32)
    adj = jax.random.normal(k_adj, (bs, N, N), dtype=jnp.float32) * 0.1
    filters = xavier_uniform(k_w, (K, Cin, Cout))

    ref = chebnet_reference(x, adj, filters)

    # f32 path: matches the reference tightly.
    out_f32 = jax.block_until_ready(chebnet_forward(x, adj, filters))
    assert out_f32.shape == (bs, N, Cout)
    assert jnp.allclose(out_f32, ref, atol=1e-4, rtol=1e-4), "f32 mismatch vs reference"

    # bf16 path: operands stay bf16 into the MXU, f32 accumulation inside the kernel.
    x16 = x.astype(jnp.bfloat16)
    adj16 = adj.astype(jnp.bfloat16)
    w16 = filters.astype(jnp.bfloat16)
    out_bf16 = jax.block_until_ready(chebnet_forward(x16, adj16, w16))
    assert out_bf16.shape == (bs, N, Cout)
    assert out_bf16.dtype == jnp.bfloat16
    assert float(jnp.max(jnp.abs(out_bf16.astype(jnp.float32) - ref))) < 0.25, \
        "bf16 mismatch vs reference"

    print("KERNEL_OK")
</pallas_src>

<mosaic_0001>
module attributes {stable_mosaic.version = 11 : i64} {
  func.func @_chebnet_kernel(%arg0: i32, %arg1: memref<1x16x4xf32, #tpu.memory_space<vmem>>, %arg2: memref<1x16x16xf32, #tpu.memory_space<vmem>>, %arg3: memref<3x4x8xf32, #tpu.memory_space<vmem>>, %arg4: memref<1x16x8xf32, #tpu.memory_space<vmem>>) attributes {dimension_semantics = [#tpu.dimension_semantics<parallel>], iteration_bounds = array<i64: 2>, scalar_prefetch = 0 : i64, scratch_operands = 0 : i64, tpu.core_type = #tpu.core_type<tc>, window_params = [{transform_indices = @transform_0, window_bounds = array<i64: 1, 16, 4>}, {transform_indices = @transform_1, window_bounds = array<i64: 1, 16, 16>}, {pipeline_mode = #tpu.pipeline_mode<synchronous>, transform_indices = @transform_2, window_bounds = array<i64: 3, 4, 8>}, {transform_indices = @transform_3, window_bounds = array<i64: 1, 16, 8>}]} {
    %c0 = arith.constant 0 : index
    %c0_0 = arith.constant 0 : index
    %c0_1 = arith.constant 0 : index
    %0 = vector.load %arg3[%c0, %c0_0, %c0_1] : memref<3x4x8xf32, #tpu.memory_space<vmem>>, vector<3x4x8xf32>
    %c0_2 = arith.constant 0 : index
    %c0_3 = arith.constant 0 : index
    %c0_4 = arith.constant 0 : index
    %1 = vector.load %arg1[%c0_2, %c0_3, %c0_4] : memref<1x16x4xf32, #tpu.memory_space<vmem>>, vector<1x16x4xf32>
    %2 = vector.shape_cast %1 : vector<1x16x4xf32> to vector<16x4xf32>
    %c0_5 = arith.constant 0 : index
    %c0_6 = arith.constant 0 : index
    %c0_7 = arith.constant 0 : index
    %3 = vector.load %arg2[%c0_5, %c0_6, %c0_7] : memref<1x16x16xf32, #tpu.memory_space<vmem>>, vector<1x16x16xf32>
    %4 = vector.shape_cast %3 : vector<1x16x16xf32> to vector<16x16xf32>
    %5 = vector.extract_strided_slice %0 {offsets = [0, 0, 0], sizes = [1, 4, 8], strides = [1, 1, 1]} : vector<3x4x8xf32> to vector<1x4x8xf32>
    %6 = vector.shape_cast %5 : vector<1x4x8xf32> to vector<4x8xf32>
    %cst = arith.constant dense<0.000000e+00> : vector<16x8xf32>
    %7 = tpu.matmul %2, %6, %cst {dimension_numbers = #tpu.dot_dimension_numbers<[1], [0], [0], [1], [0, 0, 1, 1], [], []>} : vector<16x4xf32>, vector<4x8xf32>, vector<16x8xf32> -> vector<16x8xf32>
    %cst_8 = arith.constant dense<0.000000e+00> : vector<16x4xf32>
    %8 = tpu.matmul %4, %2, %cst_8 {dimension_numbers = #tpu.dot_dimension_numbers<[1], [0], [0], [1], [0, 0, 1, 1], [], []>} : vector<16x16xf32>, vector<16x4xf32>, vector<16x4xf32> -> vector<16x4xf32>
    %9 = vector.extract_strided_slice %0 {offsets = [1, 0, 0], sizes = [1, 4, 8], strides = [1, 1, 1]} : vector<3x4x8xf32> to vector<1x4x8xf32>
    %10 = vector.shape_cast %9 : vector<1x4x8xf32> to vector<4x8xf32>
    %cst_9 = arith.constant dense<0.000000e+00> : vector<16x8xf32>
    %11 = tpu.matmul %8, %10, %cst_9 {dimension_numbers = #tpu.dot_dimension_numbers<[1], [0], [0], [1], [0, 0, 1, 1], [], []>} : vector<16x4xf32>, vector<4x8xf32>, vector<16x8xf32> -> vector<16x8xf32>
    %12 = arith.addf %7, %11 : vector<16x8xf32>
    %cst_10 = arith.constant dense<0.000000e+00> : vector<16x4xf32>
    %13 = tpu.matmul %4, %8, %cst_10 {dimension_numbers = #tpu.dot_dimension_numbers<[1], [0], [0], [1], [0, 0, 1, 1], [], []>} : vector<16x16xf32>, vector<16x4xf32>, vector<16x4xf32> -> vector<16x4xf32>
    %cst_11 = arith.constant 2.000000e+00 : f32
    %14 = vector.broadcast %cst_11 : f32 to vector<16x4xf32>
    %15 = arith.mulf %14, %13 : vector<16x4xf32>
    %16 = arith.subf %15, %2 : vector<16x4xf32>
    %17 = vector.extract_strided_slice %0 {offsets = [2, 0, 0], sizes = [1, 4, 8], strides = [1, 1, 1]} : vector<3x4x8xf32> to vector<1x4x8xf32>
    %18 = vector.shape_cast %17 : vector<1x4x8xf32> to vector<4x8xf32>
    %cst_12 = arith.constant dense<0.000000e+00> : vector<16x8xf32>
    %19 = tpu.matmul %16, %18, %cst_12 {dimension_numbers = #tpu.dot_dimension_numbers<[1], [0], [0], [1], [0, 0, 1, 1], [], []>} : vector<16x4xf32>, vector<4x8xf32>, vector<16x8xf32> -> vector<16x8xf32>
    %20 = arith.addf %12, %19 : vector<16x8xf32>
    %c0_13 = arith.constant 0 : index
    %c0_14 = arith.constant 0 : index
    %c0_15 = arith.constant 0 : index
    %21 = vector.load %arg4[%c0_13, %c0_14, %c0_15] : memref<1x16x8xf32, #tpu.memory_space<vmem>>, vector<1x16x8xf32>
    %22 = vector.shape_cast %21 : vector<1x16x8xf32> to vector<16x8xf32>
    %23 = vector.shape_cast %20 : vector<16x8xf32> to vector<1x16x8xf32>
    tpu.vector_store %arg4[%c0_13, %c0_14, %c0_15], %23 {strides = array<i32>} : memref<1x16x8xf32, #tpu.memory_space<vmem>>, vector<1x16x8xf32>,
    return
  }
  func.func @transform_0(%arg0: i32) -> (i32, i32, i32) {
    %c0_i32 = arith.constant 0 : i32
    %c0_i32_0 = arith.constant 0 : i32
    %c0_i32_1 = arith.constant 0 : i32
    return %arg0, %c0_i32, %c0_i32_0 : i32, i32, i32
  }
  func.func @transform_1(%arg0: i32) -> (i32, i32, i32) {
    %c0_i32 = arith.constant 0 : i32
    %c0_i32_0 = arith.constant 0 : i32
    %c0_i32_1 = arith.constant 0 : i32
    return %arg0, %c0_i32, %c0_i32_0 : i32, i32, i32
  }
  func.func @transform_2(%arg0: i32) -> (i32, i32, i32) {
    %c0_i32 = arith.constant 0 : i32
    %c0_i32_0 = arith.constant 0 : i32
    %c0_i32_1 = arith.constant 0 : i32
    %c0_i32_2 = arith.constant 0 : i32
    return %c0_i32, %c0_i32_0, %c0_i32_1 : i32, i32, i32
  }
  func.func @transform_3(%arg0: i32) -> (i32, i32, i32) {
    %c0_i32 = arith.constant 0 : i32
    %c0_i32_0 = arith.constant 0 : i32
    %c0_i32_1 = arith.constant 0 : i32
    return %arg0, %c0_i32, %c0_i32_0 : i32, i32, i32
  }
}

</mosaic_0001>

<llo_original>
// kernel: tpu_custom_call.1
$region0: #{tpu_custom_call.1}
  #allocation0 [shape = 'u32[]', space=smem, size = 0x4, offset = 0x4, fixed_abs, tag = 'smem constant byte address 0x4 - core index']
  #allocation1 [shape = 'u32[144,128]{1,0:T(1,128)}', space=vmem, size = 0x12000, scoped, tag = 'internal scratch']
  %s0 = inlined_call_operand.vmem [shape: f32[2,16,4], index: 0, kind: input, shape index: {}]
  %s1 = inlined_call_operand.vmem [shape: f32[2,16,16], index: 1, kind: input, shape index: {}]
  %s2 = inlined_call_operand.vmem [shape: f32[3,4,8], index: 2, kind: input, shape index: {}]
  %s3 = inlined_call_operand.vmem [shape: f32[2,16,8], index: 3, kind: output, shape index: {}]
  %s4 = sld [smem:[#allocation0]]
  $region45: #{tpu_custom_call.1} parent=0
    _
  %s6 = ssub.s32 1, %s4
  %s7 = scalar_select 0, %s6, %s4
  loop: start=0, step=1, limit=4
  $region2: #{tpu_custom_call.1} parent=0 // loop_pre_header
    _
  $region3: #{tpu_custom_call.1} parent=0 // loop_header
    %s9 = sphi 0, %s13
    %p10 = scmp.ge.s32.totalorder %s9, 4
    %s19 = sphi 0, %s21
    %s22 = sphi 0, %s19
    %s23 = sphi 0, %s22
    %s39 = sphi 0, %s23
    %s45 = sphi 0, %s47
    %s48 = sphi 0, %s45
    %s49 = sphi 0, %s48
    %s65 = sphi 0, %s49
    %s69 = sphi 0, %s69
    %s71 = sphi 0, %s69
    %s72 = sphi 0, %s71
    %s86 = sphi 0, %s72
    %s92 = sphi 0, %s94
    %s95 = sphi 0, %s92
    %s96 = sphi 0, %s95
    %s112 = sphi 0, %s96
  $region4: #{tpu_custom_call.1} parent=0 // loop_header_branch
    %12 = sbr.rel (%p10) target = $region8
  $region5: #{tpu_custom_call.1} parent=0 // loop_body
    %s14 = ssub.s32 %s9, 1
    %s15 = ssub.s32 %s9, 2
    %s16 = sadd.s32 %s9, 1
    %s17 = ssub.s32 %s9, %s16
    %p18 = scmp.eq.s32.totalorder %s17, 0
    %s20 = sadd.s32 %s19, 1
    %s21 = scalar_select %p18, %s19, %s20
    %p24 = pneg %p18
    %p25 = scmp.eq.s32.totalorder %s9, 1
    %p26 = por %p24, %p25
    %p27 = scmp.ne.s32.totalorder %s19, %s22
    %p28 = scmp.eq.s32.totalorder %s9, 0
    %p29 = por %p27, %p28
    %p30 = scmp.ne.s32.totalorder %s19, %s22
    %p31 = scmp.eq.s32.totalorder %s14, 1
    %p32 = por %p30, %p31
    %p33 = scmp.ne.s32.totalorder %s22, %s23
    %p34 = scmp.eq.s32.totalorder %s14, 0
    %p35 = por %p33, %p34
    %p36 = scmp.ne.s32.totalorder %s22, %s23
    %p37 = scmp.eq.s32.totalorder %s15, 1
    %p38 = por %p36, %p37
    %p40 = scmp.ne.s32.totalorder %s23, %s39
    %p41 = scmp.eq.s32.totalorder %s15, 0
    %p42 = por %p40, %p41
    %s43 = ssub.s32 %s9, %s16
    %p44 = scmp.eq.s32.totalorder %s43, 0
    %s46 = sadd.s32 %s45, 1
    %s47 = scalar_select %p44, %s45, %s46
    %p50 = pneg %p44
    %p51 = scmp.eq.s32.totalorder %s9, 1
    %p52 = por %p50, %p51
    %p53 = scmp.ne.s32.totalorder %s45, %s48
    %p54 = scmp.eq.s32.totalorder %s9, 0
    %p55 = por %p53, %p54
    %p56 = scmp.ne.s32.totalorder %s45, %s48
    %p57 = scmp.eq.s32.totalorder %s14, 1
    %p58 = por %p56, %p57
    %p59 = scmp.ne.s32.totalorder %s48, %s49
    %p60 = scmp.eq.s32.totalorder %s14, 0
    %p61 = por %p59, %p60
    %p62 = scmp.ne.s32.totalorder %s48, %s49
    %p63 = scmp.eq.s32.totalorder %s15, 1
    %p64 = por %p62, %p63
    %p66 = scmp.ne.s32.totalorder %s49, %s65
    %p67 = scmp.eq.s32.totalorder %s15, 0
    %p68 = por %p66, %p67
    %s70 = sadd.s32 %s69, 1
    %p73 = scmp.eq.s32.totalorder %s9, 1
    %p74 = scmp.ne.s32.totalorder %s69, %s71
    %p75 = scmp.eq.s32.totalorder %s9, 0
    %p76 = por %p74, %p75
    %p77 = scmp.ne.s32.totalorder %s69, %s71
    %p78 = scmp.eq.s32.totalorder %s14, 1
    %p79 = por %p77, %p78
    %p80 = scmp.ne.s32.totalorder %s71, %s72
    %p81 = scmp.eq.s32.totalorder %s14, 0
    %p82 = por %p80, %p81
    %p83 = scmp.ne.s32.totalorder %s71, %s72
    %p84 = scmp.eq.s32.totalorder %s15, 1
    %p85 = por %p83, %p84
    %p87 = scmp.ne.s32.totalorder %s72, %s86
    %p88 = scmp.eq.s32.totalorder %s15, 0
    %p89 = por %p87, %p88
    %s90 = ssub.s32 %s9, %s16
    %p91 = scmp.eq.s32.totalorder %s90, 0
    %s93 = sadd.s32 %s92, 1
    %s94 = scalar_select %p91, %s92, %s93
    %p97 = pneg %p91
    %p98 = scmp.eq.s32.totalorder %s9, 1
    %p99 = por %p97, %p98
    %p100 = scmp.ne.s32.totalorder %s92, %s95
    %p101 = scmp.eq.s32.totalorder %s9, 0
    %p102 = por %p100, %p101
    %p103 = scmp.ne.s32.totalorder %s92, %s95
    %p104 = scmp.eq.s32.totalorder %s14, 1
    %p105 = por %p103, %p104
    %p106 = scmp.ne.s32.totalorder %s95, %s96
    %p107 = scmp.eq.s32.totalorder %s14, 0
    %p108 = por %p106, %p107
    %p109 = scmp.ne.s32.totalorder %s95, %s96
    %p110 = scmp.eq.s32.totalorder %s15, 1
    %p111 = por %p109, %p110
    %p113 = scmp.ne.s32.totalorder %s96, %s112
    %p114 = scmp.eq.s32.totalorder %s15, 0
    %p115 = por %p113, %p114
    %p116 = scmp.le.s32.totalorder 1, %s9
    %p117 = scmp.lt.s32.totalorder %s9, 3
    %p118 = pnand %p116, %p117
    %p119 = pneg %p118
    // Predicated region
    $region9: #{tpu_custom_call.1} parent=5 // pred_check
      _
    $region10: #{tpu_custom_call.1} parent=5 // pred_check_branch
      %121 = sbr.rel (%p118) target = $region12
    $region11: #{tpu_custom_call.1} parent=5 // pred_region
      %s122 = ssub.s32 %s9, 1
      // Predicated region
      $region13: #{tpu_custom_call.1} parent=11 // pred_check
        %p123 = pneg %p82
      $region14: #{tpu_custom_call.1} parent=11 // pred_check_branch
        %125 = sbr.rel (%p123) target = $region16
      $region15: #{tpu_custom_call.1} parent=11 // pred_region
        _
      $region16: #{tpu_custom_call.1} parent=11 // pred_fallthru
        _
    $region12: #{tpu_custom_call.1} parent=5 // pred_fallthru
      _
    %p126 = scmp.lt.s32.totalorder %s9, 2
    // Predicated region
    $region17: #{tpu_custom_call.1} parent=5 // pred_check
      %p127 = pneg %p126
    $region18: #{tpu_custom_call.1} parent=5 // pred_check_branch
      %129 = sbr.rel (%p127) target = $region20
    $region19: #{tpu_custom_call.1} parent=5 // pred_region
      // Predicated region
      $region21: #{tpu_custom_call.1} parent=19 // pred_check
        %p130 = pneg %p29
      $region22: #{tpu_custom_call.1} parent=19 // pred_check_branch
        %132 = sbr.rel (%p130) target = $region24
      $region23: #{tpu_custom_call.1} parent=19 // pred_region
        %p133 = scmp.lt.s32.totalorder %s9, 1
        %s134 = scalar_select %p133, %s9, 1
        %s135 = smul.addr %s134, 2
        %s136 = smul.addr %s135, 8
        %s137 = scalar_lea.vmem %s0, %s136
      $region24: #{tpu_custom_call.1} parent=19 // pred_fallthru
        _
      // Predicated region
      $region25: #{tpu_custom_call.1} parent=19 // pred_check
        %p138 = pneg %p55
      $region26: #{tpu_custom_call.1} parent=19 // pred_check_branch
        %140 = sbr.rel (%p138) target = $region28
      $region27: #{tpu_custom_call.1} parent=19 // pred_region
        %p141 = scmp.lt.s32.totalorder %s9, 1
        %s142 = scalar_select %p141, %s9, 1
        %s143 = smul.addr %s142, 2
        %s144 = smul.addr %s143, 8
        %s145 = scalar_lea.vmem %s1, %s144
      $region28: #{tpu_custom_call.1} parent=19 // pred_fallthru
        _
    $region20: #{tpu_custom_call.1} parent=5 // pred_fallthru
      _
    %p146 = scmp.le.s32.totalorder 1, %s9
    %p147 = scmp.lt.s32.totalorder %s9, 3
    %p148 = pnand %p146, %p147
    %p149 = pneg %p148
    // Predicated region
    $region29: #{tpu_custom_call.1} parent=5 // pred_check
      _
    $region30: #{tpu_custom_call.1} parent=5 // pred_check_branch
      %151 = sbr.rel (%p148) target = $region32
    $region31: #{tpu_custom_call.1} parent=5 // pred_region
      %s152 = ssub.s32 %s9, 1
      %p153 = scmp.lt.s32.totalorder %s14, 1
      %s154 = scalar_select %p153, %s14, 1
      %s155 = smul.addr %s154, 2
      %s156 = smul.addr %s155, 8
      %s157 = scalar_lea.vmem %s0, %s156
      %p158 = pneg %p35
      %p159 = pneg %p32
      %p160 = scmp.lt.s32.totalorder %s14, 1
      %s161 = scalar_select %p160, %s14, 1
      %s162 = smul.addr %s161, 2
      %s163 = smul.addr %s162, 8
      %s164 = scalar_lea.vmem %s1, %s163
      %p165 = pneg %p61
      %p166 = pneg %p58
      %p167 = pneg %p82
      %p168 = pneg %p79
      %p169 = pneg %p108
      %p170 = pneg %p105
      %p171 = scmp.lt.s32.totalorder %s14, 1
      %s172 = scalar_select %p171, %s14, 1
      %s173 = smul.addr %s172, 2
      %s174 = smul.addr %s173, 8
      %s175 = scalar_lea.vmem %s3, %s174
      %p176 = scmp.lt.s32.totalorder %s14, 1
      %s177 = scalar_select %p176, %s14, 1
      %s178 = smul.addr %s177, 2
      %s179 = smul.addr %s178, 8
      %s180 = scalar_lea.vmem %s0, %s179
      %p181 = scmp.lt.s32.totalorder %s14, 1
      %s182 = scalar_select %p181, %s14, 1
      %s183 = smul.addr %s182, 2
      %s184 = smul.addr %s183, 8
      %s185 = scalar_lea.vmem %s1, %s184
      %p186 = scmp.lt.s32.totalorder %s14, 1
      %s187 = scalar_select %p186, %s14, 1
      %s188 = smul.addr %s187, 2
      %s189 = smul.addr %s188, 8
      %s190 = scalar_lea.vmem %s3, %s189
      %v191 = vld [vmem:[%s2] sm:$0xf]
      %v192 = vld [vmem:[%s2 + $0x4] sm:$0xf]
      %v193 = vld [vmem:[%s2 + $0x8] sm:$0xf]
      %v194 = vld [vmem:[%s180] sm:$0xff]
      %v195 = vld [vmem:[%s180 + $0x8] sm:$0xff]
      %v196 = vld [vmem:[%s185] sm:$0xff]
      %v197 = vld [vmem:[%s185 + $0x8] sm:$0xff]
      %vm198 = vcmask 130048
      %v200 = vsel %vm198, %v196, 0
      %v203 = vsel %vm198, %v197, 0
      %205 = vmatprep.subr.mxu0 0.0
      %206 = vmatpush1.msra.mxu0 %v194
      %207 = vmatprep.subr.mxu0 0.0
      %208 = vmatpush1.msra.mxu0 %v195
      %209 = vmatprep.subr.mxu0 0.0
      %210 = vmatpush1.msra.mxu0 0.0
      %211 = vmatprep.subr.mxu0 0.0
      %212 = vmatpush1.msra.mxu0 0.0
      %213 = vmatprep.subr.mxu0 0.0
      %214 = vmatpush1.msra.mxu0 0.0
      %215 = vmatprep.subr.mxu0 0.0
      %216 = vmatpush1.msra.mxu0 0.0
      %217 = vmatprep.subr.mxu0 0.0
      %218 = vmatpush1.msra.mxu0 0.0
      %219 = vmatprep.subr.mxu0 0.0
      %220 = vmatpush1.msra.mxu0 0.0
      %221 = vmatprep.subr.mxu0 0.0
      %222 = vmatpush1.msra.mxu0 0.0
      %223 = vmatprep.subr.mxu0 0.0
      %224 = vmatpush1.msra.mxu0 0.0
      %225 = vmatprep.subr.mxu0 0.0
      %226 = vmatpush1.msra.mxu0 0.0
      %227 = vmatprep.subr.mxu0 0.0
      %228 = vmatpush1.msra.mxu0 0.0
      %229 = vmatprep.subr.mxu0 0.0
      %230 = vmatpush1.msra.mxu0 0.0
      %231 = vmatprep.subr.mxu0 0.0
      %232 = vmatpush1.msra.mxu0 0.0
      %233 = vmatprep.subr.mxu0 0.0
      %234 = vmatpush1.msra.mxu0 0.0
      %235 = vmatprep.subr.mxu0 0.0
      %236 = vmatpush1.msra.mxu0 0.0
      %237 = vmatprep.subr.mxu0 0.0
      %238 = vmatpush1.msra.mxu0 0.0
      %239 = vmatprep.subr.mxu0 0.0
      %240 = vmatpush1.msra.mxu0 0.0
      %241 = vmatprep.subr.mxu0 0.0
      %242 = vmatpush1.msra.mxu0 0.0
      %243 = vmatprep.subr.mxu0 0.0
      %244 = vmatpush1.msra.mxu0 0.0
      %245 = vmatprep.subr.mxu0 0.0
      %246 = vmatpush1.msra.mxu0 0.0
      %247 = vmatprep.subr.mxu0 0.0
      %248 = vmatpush1.msra.mxu0 0.0
      %249 = vmatprep.subr.mxu0 0.0
      %250 = vmatpush1.msra.mxu0 0.0
      %251 = vmatprep.subr.mxu0 0.0
      %252 = vmatpush1.msra.mxu0 0.0
      %253 = vmatprep.subr.mxu0 0.0
      %254 = vmatpush1.msra.mxu0 0.0
      %255 = vmatprep.subr.mxu0 0.0
      %256 = vmatpush1.msra.mxu0 0.0
      %257 = vmatprep.subr.mxu0 0.0
      %258 = vmatpush1.msra.mxu0 0.0
      %259 = vmatprep.subr.mxu0 0.0
      %260 = vmatpush1.msra.mxu0 0.0
      %261 = vmatprep.subr.mxu0 0.0
      %262 = vmatpush1.msra.mxu0 0.0
      %263 = vmatprep.subr.mxu0 0.0
      %264 = vmatpush1.msra.mxu0 0.0
      %265 = vmatprep.subr.mxu0 0.0
      %266 = vmatpush1.msra.mxu0 0.0
      %267 = vmatprep.subr.mxu0 0.0
      %268 = vmatpush1.msra.mxu0 0.0
      %269 = vmatprep.mubr.f32.mxu0 0.0
      %270 = vmatmul.mubr.f32.gmra.mrb[0].mxu0 %v200
      %v271 = vpop.f32.mrb[0].mxu0
      %v272 = vadd.f32 0.0, %v271
      %v273 = vpop.f32.mrb[0].mxu0
      %274 = vmatprep.mubr.f32.mxu0 0.0
      %275 = vmatmul.mubr.f32.gmra.mrb[0].mxu0 %v203
      %v276 = vpop.f32.mrb[0].mxu0
      %v277 = vadd.f32 0.0, %v276
      %v278 = vpop.f32.mrb[0].mxu0
      %279 = vdwg.mxu0
      %vm280 = vcmask 31744
      %v282 = vsel %vm280, %v272, 0
      %v285 = vsel %vm280, %v277, 0
      %vm287 = vcmask 1043456
      %v289 = vsel %vm287, %v192, 0
      %291 = vmatprep.subr.mxu0 0.0
      %292 = vmatpush1.msra.mxu0 %v289
      %293 = vmatprep.subr.mxu0 0.0
      %294 = vmatpush1.msra.mxu0 0.0
      %295 = vmatprep.subr.mxu0 0.0
      %296 = vmatpush1.msra.mxu0 0.0
      %297 = vmatprep.subr.mxu0 0.0
      %298 = vmatpush1.msra.mxu0 0.0
      %299 = vmatprep.subr.mxu0 0.0
      %300 = vmatpush1.msra.mxu0 0.0
      %301 = vmatprep.subr.mxu0 0.0
      %302 = vmatpush1.msra.mxu0 0.0
      %303 = vmatprep.subr.mxu0 0.0
      %304 = vmatpush1.msra.mxu0 0.0
      %305 = vmatprep.subr.mxu0 0.0
      %306 = vmatpush1.msra.mxu0 0.0
      %307 = vmatprep.subr.mxu0 0.0
      %308 = vmatpush1.msra.mxu0 0.0
      %309 = vmatprep.subr.mxu0 0.0
      %310 = vmatpush1.msra.mxu0 0.0
      %311 = vmatprep.subr.mxu0 0.0
      %312 = vmatpush1.msra.mxu0 0.0
      %313 = vmatprep.subr.mxu0 0.0
      %314 = vmatpush1.msra.mxu0 0.0
      %315 = vmatprep.subr.mxu0 0.0
      %316 = vmatpush1.msra.mxu0 0.0
      %317 = vmatprep.subr.mxu0 0.0
      %318 = vmatpush1.msra.mxu0 0.0
      %319 = vmatprep.subr.mxu0 0.0
      %320 = vmatpush1.msra.mxu0 0.0
      %321 = vmatprep.subr.mxu0 0.0
      %322 = vmatpush1.msra.mxu0 0.0
      %323 = vmatprep.subr.mxu0 0.0
      %324 = vmatpush1.msra.mxu0 0.0
      %325 = vmatprep.subr.mxu0 0.0
      %326 = vmatpush1.msra.mxu0 0.0
      %327 = vmatprep.subr.mxu0 0.0
      %328 = vmatpush1.msra.mxu0 0.0
      %329 = vmatprep.subr.mxu0 0.0
      %330 = vmatpush1.msra.mxu0 0.0
      %331 = vmatprep.subr.mxu0 0.0
      %332 = vmatpush1.msra.mxu0 0.0
      %333 = vmatprep.subr.mxu0 0.0
      %334 = vmatpush1.msra.mxu0 0.0
      %335 = vmatprep.subr.mxu0 0.0
      %336 = vmatpush1.msra.mxu0 0.0
      %337 = vmatprep.subr.mxu0 0.0
      %338 = vmatpush1.msra.mxu0 0.0
      %339 = vmatprep.subr.mxu0 0.0
      %340 = vmatpush1.msra.mxu0 0.0
      %341 = vmatprep.subr.mxu0 0.0
      %342 = vmatpush1.msra.mxu0 0.0
      %343 = vmatprep.subr.mxu0 0.0
      %344 = vmatpush1.msra.mxu0 0.0
      %345 = vmatprep.subr.mxu0 0.0
      %346 = vmatpush1.msra.mxu0 0.0
      %347 = vmatprep.subr.mxu0 0.0
      %348 = vmatpush1.msra.mxu0 0.0
      %349 = vmatprep.subr.mxu0 0.0
      %350 = vmatpush1.msra.mxu0 0.0
      %351 = vmatprep.subr.mxu0 0.0
      %352 = vmatpush1.msra.mxu0 0.0
      %353 = vmatprep.subr.mxu0 0.0
      %354 = vmatpush1.msra.mxu0 0.0
      %355 = vmatprep.mubr.f32.mxu0 0.0
      %356 = vmatmul.mubr.f32.gmra.mrb[0].mxu0 %v282
      %v357 = vpop.f32.mrb[0].mxu0
      %v358 = vadd.f32 0.0, %v357
      %v359 = vpop.f32.mrb[0].mxu0
      %360 = vmatprep.mubr.f32.mxu0 0.0
      %361 = vmatmul.mubr.f32.gmra.mrb[0].mxu0 %v285
      %v362 = vpop.f32.mrb[0].mxu0
      %v363 = vadd.f32 0.0, %v362
      %v364 = vpop.f32.mrb[0].mxu0
      %365 = vdwg.mxu0
      %v367 = vsel %vm280, %v194, 0
      %v370 = vsel %vm280, %v195, 0
      %v373 = vsel %vm287, %v191, 0
      %375 = vmatprep.subr.mxu0 0.0
      %376 = vmatpush1.msra.mxu0 %v373
      %377 = vmatprep.subr.mxu0 0.0
      %378 = vmatpush1.msra.mxu0 0.0
      %379 = vmatprep.subr.mxu0 0.0
      %380 = vmatpush1.msra.mxu0 0.0
      %381 = vmatprep.subr.mxu0 0.0
      %382 = vmatpush1.msra.mxu0 0.0
      %383 = vmatprep.subr.mxu0 0.0
      %384 = vmatpush1.msra.mxu0 0.0
      %385 = vmatprep.subr.mxu0 0.0
      %386 = vmatpush1.msra.mxu0 0.0
      %387 = vmatprep.subr.mxu0 0.0
      %388 = vmatpush1.msra.mxu0 0.0
      %389 = vmatprep.subr.mxu0 0.0
      %390 = vmatpush1.msra.mxu0 0.0
      %391 = vmatprep.subr.mxu0 0.0
      %392 = vmatpush1.msra.mxu0 0.0
      %393 = vmatprep.subr.mxu0 0.0
      %394 = vmatpush1.msra.mxu0 0.0
      %395 = vmatprep.subr.mxu0 0.0
      %396 = vmatpush1.msra.mxu0 0.0
      %397 = vmatprep.subr.mxu0 0.0
      %398 = vmatpush1.msra.mxu0 0.0
      %399 = vmatprep.subr.mxu0 0.0
      %400 = vmatpush1.msra.mxu0 0.0
      %401 = vmatprep.subr.mxu0 0.0
      %402 = vmatpush1.msra.mxu0 0.0
      %403 = vmatprep.subr.mxu0 0.0
      %404 = vmatpush1.msra.mxu0 0.0
      %405 = vmatprep.subr.mxu0 0.0
      %406 = vmatpush1.msra.mxu0 0.0
      %407 = vmatprep.subr.mxu0 0.0
      %408 = vmatpush1.msra.mxu0 0.0
      %409 = vmatprep.subr.mxu0 0.0
      %410 = vmatpush1.msra.mxu0 0.0
      %411 = vmatprep.subr.mxu0 0.0
      %412 = vmatpush1.msra.mxu0 0.0
      %413 = vmatprep.subr.mxu0 0.0
      %414 = vmatpush1.msra.mxu0 0.0
      %415 = vmatprep.subr.mxu0 0.0
      %416 = vmatpush1.msra.mxu0 0.0
      %417 = vmatprep.subr.mxu0 0.0
      %418 = vmatpush1.msra.mxu0 0.0
      %419 = vmatprep.subr.mxu0 0.0
      %420 = vmatpush1.msra.mxu0 0.0
      %421 = vmatprep.subr.mxu0 0.0
      %422 = vmatpush1.msra.mxu0 0.0
      %423 = vmatprep.subr.mxu0 0.0
      %424 = vmatpush1.msra.mxu0 0.0
      %425 = vmatprep.subr.mxu0 0.0
      %426 = vmatpush1.msra.mxu0 0.0
      %427 = vmatprep.subr.mxu0 0.0
      %428 = vmatpush1.msra.mxu0 0.0
      %429 = vmatprep.subr.mxu0 0.0
      %430 = vmatpush1.msra.mxu0 0.0
      %431 = vmatprep.subr.mxu0 0.0
      %432 = vmatpush1.msra.mxu0 0.0
      %433 = vmatprep.subr.mxu0 0.0
      %434 = vmatpush1.msra.mxu0 0.0
      %435 = vmatprep.subr.mxu0 0.0
      %436 = vmatpush1.msra.mxu0 0.0
      %437 = vmatprep.subr.mxu0 0.0
      %438 = vmatpush1.msra.mxu0 0.0
      %439 = vmatprep.mubr.f32.mxu0 0.0
      %440 = vmatmul.mubr.f32.gmra.mrb[0].mxu0 %v367
      %v441 = vpop.f32.mrb[0].mxu0
      %v442 = vadd.f32 %v358, %v441
      %v443 = vpop.f32.mrb[0].mxu0
      %444 = vmatprep.mubr.f32.mxu0 0.0
      %445 = vmatmul.mubr.f32.gmra.mrb[0].mxu0 %v370
      %v446 = vpop.f32.mrb[0].mxu0
      %v447 = vadd.f32 %v363, %v446
      %v448 = vpop.f32.mrb[0].mxu0
      %449 = vdwg.mxu0
      %450 = vmatprep.subr.mxu0 0.0
      %451 = vmatpush1.msra.mxu0 %v272
      %452 = vmatprep.subr.mxu0 0.0
      %453 = vmatpush1.msra.mxu0 %v277
      %454 = vmatprep.subr.mxu0 0.0
      %455 = vmatpush1.msra.mxu0 0.0
      %456 = vmatprep.subr.mxu0 0.0
      %457 = vmatpush1.msra.mxu0 0.0
      %458 = vmatprep.subr.mxu0 0.0
      %459 = vmatpush1.msra.mxu0 0.0
      %460 = vmatprep.subr.mxu0 0.0
      %461 = vmatpush1.msra.mxu0 0.0
      %462 = vmatprep.subr.mxu0 0.0
      %463 = vmatpush1.msra.mxu0 0.0
      %464 = vmatprep.subr.mxu0 0.0
      %465 = vmatpush1.msra.mxu0 0.0
      %466 = vmatprep.subr.mxu0 0.0
      %467 = vmatpush1.msra.mxu0 0.0
      %468 = vmatprep.subr.mxu0 0.0
      %469 = vmatpush1.msra.mxu0 0.0
      %470 = vmatprep.subr.mxu0 0.0
      %471 = vmatpush1.msra.mxu0 0.0
      %472 = vmatprep.subr.mxu0 0.0
      %473 = vmatpush1.msra.mxu0 0.0
      %474 = vmatprep.subr.mxu0 0.0
      %475 = vmatpush1.msra.mxu0 0.0
      %476 = vmatprep.subr.mxu0 0.0
      %477 = vmatpush1.msra.mxu0 0.0
      %478 = vmatprep.subr.mxu0 0.0
      %479 = vmatpush1.msra.mxu0 0.0
      %480 = vmatprep.subr.mxu0 0.0
      %481 = vmatpush1.msra.mxu0 0.0
      %482 = vmatprep.subr.mxu0 0.0
      %483 = vmatpush1.msra.mxu0 0.0
      %484 = vmatprep.subr.mxu0 0.0
      %485 = vmatpush1.msra.mxu0 0.0
      %486 = vmatprep.subr.mxu0 0.0
      %487 = vmatpush1.msra.mxu0 0.0
      %488 = vmatprep.subr.mxu0 0.0
      %489 = vmatpush1.msra.mxu0 0.0
      %490 = vmatprep.subr.mxu0 0.0
      %491 = vmatpush1.msra.mxu0 0.0
      %492 = vmatprep.subr.mxu0 0.0
      %493 = vmatpush1.msra.mxu0 0.0
      %494 = vmatprep.subr.mxu0 0.0
      %495 = vmatpush1.msra.mxu0 0.0
      %496 = vmatprep.subr.mxu0 0.0
      %497 = vmatpush1.msra.mxu0 0.0
      %498 = vmatprep.subr.mxu0 0.0
      %499 = vmatpush1.msra.mxu0 0.0
      %500 = vmatprep.subr.mxu0 0.0
      %501 = vmatpush1.msra.mxu0 0.0
      %502 = vmatprep.subr.mxu0 0.0
      %503 = vmatpush1.msra.mxu0 0.0
      %504 = vmatprep.subr.mxu0 0.0
      %505 = vmatpush1.msra.mxu0 0.0
      %506 = vmatprep.subr.mxu0 0.0
      %507 = vmatpush1.msra.mxu0 0.0
      %508 = vmatprep.subr.mxu0 0.0
      %509 = vmatpush1.msra.mxu0 0.0
      %510 = vmatprep.subr.mxu0 0.0
      %511 = vmatpush1.msra.mxu0 0.0
      %512 = vmatprep.subr.mxu0 0.0
      %513 = vmatpush1.msra.mxu0 0.0
      %514 = vmatprep.mubr.f32.mxu0 0.0
      %515 = vmatmul.mubr.f32.gmra.mrb[0].mxu0 %v200
      %v516 = vpop.f32.mrb[0].mxu0
      %v517 = vadd.f32 0.0, %v516
      %v518 = vpop.f32.mrb[0].mxu0
      %519 = vmatprep.mubr.f32.mxu0 0.0
      %520 = vmatmul.mubr.f32.gmra.mrb[0].mxu0 %v203
      %v521 = vpop.f32.mrb[0].mxu0
      %v522 = vadd.f32 0.0, %v521
      %v523 = vpop.f32.mrb[0].mxu0
      %524 = vdwg.mxu0
      %v525 = vmul.f32 %v517, 2.0
      %v526 = vmul.f32 %v522, 2.0
      %v527 = vsub.f32 %v525, %v194
      %v528 = vsub.f32 %v526, %v195
      %v530 = vsel %vm280, %v527, 0
      %v533 = vsel %vm280, %v528, 0
      %v536 = vsel %vm287, %v193, 0
      %538 = vmatprep.subr.mxu0 0.0
      %539 = vmatpush1.msra.mxu0 %v536
      %540 = vmatprep.subr.mxu0 0.0
      %541 = vmatpush1.msra.mxu0 0.0
      %542 = vmatprep.subr.mxu0 0.0
      %543 = vmatpush1.msra.mxu0 0.0
      %544 = vmatprep.subr.mxu0 0.0
      %545 = vmatpush1.msra.mxu0 0.0
      %546 = vmatprep.subr.mxu0 0.0
      %547 = vmatpush1.msra.mxu0 0.0
      %548 = vmatprep.subr.mxu0 0.0
      %549 = vmatpush1.msra.mxu0 0.0
      %550 = vmatprep.subr.mxu0 0.0
      %551 = vmatpush1.msra.mxu0 0.0
      %552 = vmatprep.subr.mxu0 0.0
      %553 = vmatpush1.msra.mxu0 0.0
      %554 = vmatprep.subr.mxu0 0.0
      %555 = vmatpush1.msra.mxu0 0.0
      %556 = vmatprep.subr.mxu0 0.0
      %557 = vmatpush1.msra.mxu0 0.0
      %558 = vmatprep.subr.mxu0 0.0
      %559 = vmatpush1.msra.mxu0 0.0
      %560 = vmatprep.subr.mxu0 0.0
      %561 = vmatpush1.msra.mxu0 0.0
      %562 = vmatprep.subr.mxu0 0.0
      %563 = vmatpush1.msra.mxu0 0.0
      %564 = vmatprep.subr.mxu0 0.0
      %565 = vmatpush1.msra.mxu0 0.0
      %566 = vmatprep.subr.mxu0 0.0
      %567 = vmatpush1.msra.mxu0 0.0
      %568 = vmatprep.subr.mxu0 0.0
      %569 = vmatpush1.msra.mxu0 0.0
      %570 = vmatprep.subr.mxu0 0.0
      %571 = vmatpush1.msra.mxu0 0.0
      %572 = vmatprep.subr.mxu0 0.0
      %573 = vmatpush1.msra.mxu0 0.0
      %574 = vmatprep.subr.mxu0 0.0
      %575 = vmatpush1.msra.mxu0 0.0
      %576 = vmatprep.subr.mxu0 0.0
      %577 = vmatpush1.msra.mxu0 0.0
      %578 = vmatprep.subr.mxu0 0.0
      %579 = vmatpush1.msra.mxu0 0.0
      %580 = vmatprep.subr.mxu0 0.0
      %581 = vmatpush1.msra.mxu0 0.0
      %582 = vmatprep.subr.mxu0 0.0
      %583 = vmatpush1.msra.mxu0 0.0
      %584 = vmatprep.subr.mxu0 0.0
      %585 = vmatpush1.msra.mxu0 0.0
      %586 = vmatprep.subr.mxu0 0.0
      %587 = vmatpush1.msra.mxu0 0.0
      %588 = vmatprep.subr.mxu0 0.0
      %589 = vmatpush1.msra.mxu0 0.0
      %590 = vmatprep.subr.mxu0 0.0
      %591 = vmatpush1.msra.mxu0 0.0
      %592 = vmatprep.subr.mxu0 0.0
      %593 = vmatpush1.msra.mxu0 0.0
      %594 = vmatprep.subr.mxu0 0.0
      %595 = vmatpush1.msra.mxu0 0.0
      %596 = vmatprep.subr.mxu0 0.0
      %597 = vmatpush1.msra.mxu0 0.0
      %598 = vmatprep.subr.mxu0 0.0
      %599 = vmatpush1.msra.mxu0 0.0
      %600 = vmatprep.subr.mxu0 0.0
      %601 = vmatpush1.msra.mxu0 0.0
      %602 = vmatprep.mubr.f32.mxu0 0.0
      %603 = vmatmul.mubr.f32.gmra.mrb[0].mxu0 %v530
      %v604 = vpop.f32.mrb[0].mxu0
      %v605 = vadd.f32 0.0, %v604
      %v606 = vpop.f32.mrb[0].mxu0
      %607 = vmatprep.mubr.f32.mxu0 0.0
      %608 = vmatmul.mubr.f32.gmra.mrb[0].mxu0 %v533
      %v609 = vpop.f32.mrb[0].mxu0
      %v610 = vadd.f32 0.0, %v609
      %v611 = vpop.f32.mrb[0].mxu0
      %612 = vdwg.mxu0
      %v613 = vadd.f32 %v442, %v605
      %v614 = vadd.f32 %v447, %v610
      %vm615 = vcmask 64512
      %616 = vst.msk [vmem:[%s190] sm:$0xff] %vm615, %v613
      %617 = vst.msk [vmem:[%s190 + $0x8] sm:$0xff] %vm615, %v614
      %p618 = scmp.lt.s32.totalorder %s14, 1
      %s619 = scalar_select %p618, %s14, 1
      %s620 = smul.addr %s619, 2
      %s621 = smul.addr %s620, 8
      %s622 = scalar_lea.vmem %s3, %s621
      // Predicated region
      $region33: #{tpu_custom_call.1} parent=31 // pred_check
        %p623 = pneg %p105
      $region34: #{tpu_custom_call.1} parent=31 // pred_check_branch
        %625 = sbr.rel (%p623) target = $region36
      $region35: #{tpu_custom_call.1} parent=31 // pred_region
        _
      $region36: #{tpu_custom_call.1} parent=31 // pred_fallthru
        _
    $region32: #{tpu_custom_call.1} parent=5 // pred_fallthru
      _
    %p626 = scmp.le.s32.totalorder 2, %s9
    // Predicated region
    $region37: #{tpu_custom_call.1} parent=5 // pred_check
      %p627 = pneg %p626
    $region38: #{tpu_custom_call.1} parent=5 // pred_check_branch
      %629 = sbr.rel (%p627) target = $region40
    $region39: #{tpu_custom_call.1} parent=5 // pred_region
      %s630 = ssub.s32 %s9, 2
      // Predicated region
      $region41: #{tpu_custom_call.1} parent=39 // pred_check
        %p631 = pneg %p111
      $region42: #{tpu_custom_call.1} parent=39 // pred_check_branch
        %633 = sbr.rel (%p631) target = $region44
      $region43: #{tpu_custom_call.1} parent=39 // pred_region
        %p634 = scmp.lt.s32.totalorder %s15, 1
        %s635 = scalar_select %p634, %s15, 1
        %s636 = smul.addr %s635, 2
        %s637 = smul.addr %s636, 8
        %s638 = scalar_lea.vmem %s3, %s637
      $region44: #{tpu_custom_call.1} parent=39 // pred_fallthru
        _
    $region40: #{tpu_custom_call.1} parent=5 // pred_fallthru
      _
  $region6: #{tpu_custom_call.1} parent=0 // loop_footer
    %s13 = sadd.s32 1, %s9
  $region7: #{tpu_custom_call.1} parent=0 // loop_footer_branch
    %8 = sbr.rel target = $region3
  $region8: #{tpu_custom_call.1} parent=0 // loop_exit
    _

</llo_original>
